<compile_context>
chip_gen: v6e
topology: v6e:2x2x1
jax: 0.10.0
libtpu: 0.0.40
codegen_flags: <defaults>
</compile_context>

<pallas_src>
import jax
import jax.numpy as jnp
from jax.experimental import pallas as pl
from jax.experimental.pallas import tpu as pltpu

BN_EPS = 1e-5
LANE = 128
SUBLANE = 8

VMEM_LIMIT_BYTES = 48 * 1024 * 1024      # <= v7x physical 64 MiB, leaves headroom
VMEM_WORKING_BUDGET = 32 * 1024 * 1024   # what _choose_tm sizes against
MAX_TM = 2048


def _round_up(n, m):
    return ((n + m - 1) // m) * m


# ----------------------------- Pallas kernel ------------------------------- #

def _make_fused_mlp_kernel(num_layers, final_is_plain_linear):
    """Kernel computing the whole MLP on one (TM, d_in) batch tile.

    Ref layout: (x_ref, w0, b0, w1, b1, ..., w_{L-1}, b_{L-1}, o_ref).
    BatchNorm is pre-folded into (w, b); weights are bf16 with output dims
    zero-padded to 128 lanes; biases are f32.  Each layer is
    h_{i+1} = relu(h_i @ W_i + b_i) with f32 MXU accumulation, bf16 hand-off
    between layers, and no ReLU on the final plain Linear.  The running
    activation never leaves VMEM/vregs (no inter-layer HBM traffic).
    """
    def kernel(*refs):
        x_ref = refs[0]
        o_ref = refs[-1]
        wb = refs[1:-1]
        h = x_ref[...].astype(jnp.bfloat16)          # cast in-kernel: no extra HBM pass
        for i in range(num_layers):
            w = wb[2 * i][...]                       # bf16 (k, dout_pad)
            b = wb[2 * i + 1][...]                   # f32  (1, dout_pad)
            y = jnp.dot(h, w, preferred_element_type=jnp.float32) + b
            is_last = i == num_layers - 1
            if not (is_last and final_is_plain_linear):
                # ReLU in f32 (Dropout is identity at inference time).
                y = jnp.maximum(y, 0.0)
            if is_last:
                h = y                                # keep f32 for the store
            else:
                h = y.astype(jnp.bfloat16)           # bf16 hand-off to next matmul
        o_ref[...] = h.astype(o_ref.dtype)

    return kernel


# --------------------------- Parameter construction ------------------------ #

def init_deep_network_params(key, input_dim, hidden_dims, output_layer=True):
    """Deterministic synthetic init matching the PyTorch module's shapes."""
    params = {"hidden": [], "out": None}
    din = input_dim
    for dout in hidden_dims:
        key, kw, kb, kg, kbt, km, kv = jax.random.split(key, 7)
        bound = 1.0 / jnp.sqrt(jnp.float32(din))
        layer = dict(
            w=jax.random.uniform(kw, (din, dout), jnp.float32, -bound, bound),
            b=jax.random.uniform(kb, (dout,), jnp.float32, -bound, bound),
            gamma=jax.random.uniform(kg, (dout,), jnp.float32, 0.5, 1.5),
            beta=jax.random.uniform(kbt, (dout,), jnp.float32, -0.1, 0.1),
            mean=jax.random.uniform(km, (dout,), jnp.float32, -0.1, 0.1),
            var=jax.random.uniform(kv, (dout,), jnp.float32, 0.5, 1.5),
        )
        params["hidden"].append(layer)
        din = dout
    if output_layer:
        key, kw, kb = jax.random.split(key, 3)
        bound = 1.0 / jnp.sqrt(jnp.float32(din))
        params["out"] = dict(
            w=jax.random.uniform(kw, (din, 1), jnp.float32, -bound, bound),
            b=jax.random.uniform(kb, (1,), jnp.float32, -bound, bound),
        )
    return params


def prepare_fused_params(params, input_dim, weight_dtype=jnp.bfloat16):
    """One-time prep (call at model-load time, NOT per forward call).

    Folds BatchNorm into each Linear:
        scale = gamma * rsqrt(var + eps);  W' = W * scale;  b' = (b - mean)*scale + beta
    Pads every layer's OUTPUT dim to a multiple of 128 lanes (zero padding, so
    ReLU keeps pad columns at exactly 0 and zero rows in the next W preserve the
    unpadded math).  The FIRST layer's contraction dim is left at the raw
    input_dim so x can be fed to the kernel unpadded.  Weights are cast to bf16,
    biases stay f32.

    Returns (layers, out_dim, out_pad, has_out) with layers = [(w, b), ...].
    """
    layers = []
    din = input_dim          # true width of the previous layer's output
    din_k = input_dim        # width as seen by the kernel (padded after layer 0)
    for layer in params["hidden"]:
        dout = layer["w"].shape[1]
        dout_pad = _round_up(dout, LANE)
        scale = layer["gamma"] * jax.lax.rsqrt(layer["var"] + BN_EPS)
        w_f = layer["w"] * scale[None, :]
        b_f = (layer["b"] - layer["mean"]) * scale + layer["beta"]
        w_p = jnp.zeros((din_k, dout_pad), jnp.float32).at[:din, :dout].set(w_f)
        b_p = jnp.zeros((1, dout_pad), jnp.float32).at[0, :dout].set(b_f)
        layers.append((w_p.astype(weight_dtype), b_p))
        din, din_k = dout, dout_pad

    has_out = params["out"] is not None
    if has_out:
        w, b = params["out"]["w"], params["out"]["b"]
        dout = w.shape[1]                      # 1
        dout_pad = _round_up(dout, LANE)       # 128 -> lane-dense store
        w_p = jnp.zeros((din_k, dout_pad), jnp.float32).at[:din, :dout].set(w)
        b_p = jnp.zeros((1, dout_pad), jnp.float32).at[0, :dout].set(b)
        layers.append((w_p.astype(weight_dtype), b_p))
        out_dim, out_pad = dout, dout_pad
    else:
        out_dim, out_pad = din, din_k
    return layers, out_dim, out_pad, has_out


# ------------------------------- Tile sizing -------------------------------- #

def _choose_tm(batch, x_row_bytes, out_row_bytes, act_row_bytes, weight_bytes,
               vmem_budget=VMEM_WORKING_BUDGET):
    """VMEM-budget-driven batch tile.

    Accounts for: double-buffered x/out blocks (2x), resident weights which are
    also double-buffered by default (2x; their index_map is constant so this is
    pure overhead -- kept in the budget instead of pipeline_mode tweaks), and a
    conservative per-row estimate for the in-flight activations.
    Also caps TM so the grid has >= 2 tiles when the batch allows (v7x megacore).
    """
    if batch <= SUBLANE:
        return batch                       # single full-dim block, always legal
    per_row = 2 * (x_row_bytes + out_row_bytes) + act_row_bytes
    avail = max(vmem_budget - 2 * weight_bytes, per_row * SUBLANE)
    tm_budget = max(SUBLANE, min(MAX_TM, (avail // per_row) // SUBLANE * SUBLANE))
    tm_two_tiles = _round_up(pl.cdiv(batch, 2), SUBLANE)   # >=2 tiles when possible
    tm = min(tm_budget, tm_two_tiles, _round_up(batch, SUBLANE))
    return max(SUBLANE, tm)


# ------------------------------- Forward pass ------------------------------ #

def make_deep_network_forward(params, input_dim):
    """Build a jitted Pallas-backed forward.  Parameter prep happens ONCE here."""
    layers, out_dim, out_pad, has_out = prepare_fused_params(params, input_dim)
    num_layers = len(layers)
    flat_wb = tuple(a for wb in layers for a in wb)      # cached padded params
    kernel = _make_fused_mlp_kernel(num_layers=num_layers,
                                    final_is_plain_linear=has_out)

    def fwd(x, *wb):
        B, d_in = x.shape
        ws = [wb[2 * i] for i in range(num_layers)]
        bs = [wb[2 * i + 1] for i in range(num_layers)]

        x_row_bytes = d_in * x.dtype.itemsize
        out_row_bytes = out_pad * 4                      # f32 output block
        act_row_bytes = sum(w.shape[1] for w in ws) * 6  # f32 acc + bf16 copy
        weight_bytes = sum(a.size * a.dtype.itemsize for a in wb)
        tm = _choose_tm(B, x_row_bytes, out_row_bytes, act_row_bytes, weight_bytes)
        grid = (pl.cdiv(B, tm),)                         # partial tail tile OK

        flat_inputs = [x]
        in_specs = [pl.BlockSpec((tm, d_in), lambda i: (i, 0))]   # unpadded x
        for w, b in zip(ws, bs):
            flat_inputs += [w, b]
            # Weights/biases: full-array blocks, resident across all batch tiles.
            in_specs.append(pl.BlockSpec(w.shape, lambda i: (0, 0)))
            in_specs.append(pl.BlockSpec(b.shape, lambda i: (0, 0)))

        y_pad = pl.pallas_call(
            kernel,
            out_shape=jax.ShapeDtypeStruct((B, out_pad), jnp.float32),
            grid=grid,
            in_specs=in_specs,
            out_specs=pl.BlockSpec((tm, out_pad), lambda i: (i, 0)),
            compiler_params=pltpu.CompilerParams(
                dimension_semantics=("parallel",),       # megacore on v7x
                vmem_limit_bytes=VMEM_LIMIT_BYTES,
            ),
        )(*flat_inputs)
        return y_pad[:, :out_dim]

    fwd_jit = jax.jit(fwd)

    def run(x):
        return fwd_jit(x, *flat_wb)

    return run


# ------------------------------ Pure-JAX reference ------------------------- #

def deep_network_reference(params, x):
    h = x
    for layer in params["hidden"]:
        y = h @ layer["w"] + layer["b"]
        y = (y - layer["mean"]) * jax.lax.rsqrt(layer["var"] + BN_EPS) * layer["gamma"] + layer["beta"]
        h = jnp.maximum(y, 0.0)
    if params["out"] is not None:
        h = h @ params["out"]["w"] + params["out"]["b"]
    return h


# ---------------------------------- Main ----------------------------------- #

if __name__ == "__main__":
    key = jax.random.PRNGKey(0)
    batch = 8
    input_dim = 32          # embed_dim * field_dim
    hidden_dims = (64, 32)
    dropout = 0.5           # identity at inference

    kx, kp = jax.random.split(key)
    x = jax.random.normal(kx, (batch, input_dim), jnp.float32)
    params = init_deep_network_params(kp, input_dim, hidden_dims, output_layer=True)

    forward = make_deep_network_forward(params, input_dim)   # prep runs once here
    out = jax.block_until_ready(forward(x))

    ref = deep_network_reference(params, x)
    assert out.shape == (batch, 1), out.shape
    # bf16 weights/activations inside the kernel -> looser tolerance vs f32 ref.
    max_err = jnp.max(jnp.abs(out - ref))
    assert jnp.allclose(out, ref, atol=5e-2, rtol=5e-2), f"max abs err {max_err}"

    print("KERNEL_OK")
</pallas_src>

<mosaic_0001>
module attributes {stable_mosaic.version = 11 : i64} {
  func.func @kernel(%arg0: i32, %arg1: memref<8x32xf32, #tpu.memory_space<vmem>>, %arg2: memref<32x128xbf16, #tpu.memory_space<vmem>>, %arg3: memref<1x128xf32, #tpu.memory_space<vmem>>, %arg4: memref<128x128xbf16, #tpu.memory_space<vmem>>, %arg5: memref<1x128xf32, #tpu.memory_space<vmem>>, %arg6: memref<128x128xbf16, #tpu.memory_space<vmem>>, %arg7: memref<1x128xf32, #tpu.memory_space<vmem>>, %arg8: memref<8x128xf32, #tpu.memory_space<vmem>>) attributes {dimension_semantics = [#tpu.dimension_semantics<parallel>], iteration_bounds = array<i64: 1>, scalar_prefetch = 0 : i64, scratch_operands = 0 : i64, tpu.core_type = #tpu.core_type<tc>, window_params = [{transform_indices = @transform_0, window_bounds = array<i64: 8, 32>}, {pipeline_mode = #tpu.pipeline_mode<synchronous>, transform_indices = @transform_1, window_bounds = array<i64: 32, 128>}, {pipeline_mode = #tpu.pipeline_mode<synchronous>, transform_indices = @transform_2, window_bounds = array<i64: 1, 128>}, {pipeline_mode = #tpu.pipeline_mode<synchronous>, transform_indices = @transform_3, window_bounds = array<i64: 128, 128>}, {pipeline_mode = #tpu.pipeline_mode<synchronous>, transform_indices = @transform_4, window_bounds = array<i64: 1, 128>}, {pipeline_mode = #tpu.pipeline_mode<synchronous>, transform_indices = @transform_5, window_bounds = array<i64: 128, 128>}, {pipeline_mode = #tpu.pipeline_mode<synchronous>, transform_indices = @transform_6, window_bounds = array<i64: 1, 128>}, {transform_indices = @transform_7, window_bounds = array<i64: 8, 128>}]} {
    %c0 = arith.constant 0 : index
    %c0_0 = arith.constant 0 : index
    %0 = vector.load %arg1[%c0, %c0_0] : memref<8x32xf32, #tpu.memory_space<vmem>>, vector<8x32xf32>
    %1 = arith.truncf %0 : vector<8x32xf32> to vector<8x32xbf16>
    %c0_1 = arith.constant 0 : index
    %c0_2 = arith.constant 0 : index
    %2 = vector.load %arg2[%c0_1, %c0_2] : memref<32x128xbf16, #tpu.memory_space<vmem>>, vector<32x128xbf16>
    %c0_3 = arith.constant 0 : index
    %c0_4 = arith.constant 0 : index
    %3 = vector.load %arg3[%c0_3, %c0_4] : memref<1x128xf32, #tpu.memory_space<vmem>>, vector<1x128xf32>
    %cst = arith.constant dense<0.000000e+00> : vector<8x128xf32>
    %4 = tpu.matmul %1, %2, %cst {dimension_numbers = #tpu.dot_dimension_numbers<[1], [0], [0], [1], [0, 0, 1, 1], [], []>} : vector<8x32xbf16>, vector<32x128xbf16>, vector<8x128xf32> -> vector<8x128xf32>
    %5 = vector.broadcast %3 : vector<1x128xf32> to vector<8x128xf32>
    %6 = arith.addf %4, %5 : vector<8x128xf32>
    %cst_5 = arith.constant 0.000000e+00 : f32
    %7 = vector.broadcast %cst_5 : f32 to vector<8x128xf32>
    %8 = arith.maximumf %6, %7 : vector<8x128xf32>
    %9 = arith.truncf %8 : vector<8x128xf32> to vector<8x128xbf16>
    %c0_6 = arith.constant 0 : index
    %c0_7 = arith.constant 0 : index
    %10 = vector.load %arg4[%c0_6, %c0_7] : memref<128x128xbf16, #tpu.memory_space<vmem>>, vector<128x128xbf16>
    %c0_8 = arith.constant 0 : index
    %c0_9 = arith.constant 0 : index
    %11 = vector.load %arg5[%c0_8, %c0_9] : memref<1x128xf32, #tpu.memory_space<vmem>>, vector<1x128xf32>
    %cst_10 = arith.constant dense<0.000000e+00> : vector<8x128xf32>
    %12 = tpu.matmul %9, %10, %cst_10 {dimension_numbers = #tpu.dot_dimension_numbers<[1], [0], [0], [1], [0, 0, 1, 1], [], []>} : vector<8x128xbf16>, vector<128x128xbf16>, vector<8x128xf32> -> vector<8x128xf32>
    %13 = vector.broadcast %11 : vector<1x128xf32> to vector<8x128xf32>
    %14 = arith.addf %12, %13 : vector<8x128xf32>
    %cst_11 = arith.constant 0.000000e+00 : f32
    %15 = vector.broadcast %cst_11 : f32 to vector<8x128xf32>
    %16 = arith.maximumf %14, %15 : vector<8x128xf32>
    %17 = arith.truncf %16 : vector<8x128xf32> to vector<8x128xbf16>
    %c0_12 = arith.constant 0 : index
    %c0_13 = arith.constant 0 : index
    %18 = vector.load %arg6[%c0_12, %c0_13] : memref<128x128xbf16, #tpu.memory_space<vmem>>, vector<128x128xbf16>
    %c0_14 = arith.constant 0 : index
    %c0_15 = arith.constant 0 : index
    %19 = vector.load %arg7[%c0_14, %c0_15] : memref<1x128xf32, #tpu.memory_space<vmem>>, vector<1x128xf32>
    %cst_16 = arith.constant dense<0.000000e+00> : vector<8x128xf32>
    %20 = tpu.matmul %17, %18, %cst_16 {dimension_numbers = #tpu.dot_dimension_numbers<[1], [0], [0], [1], [0, 0, 1, 1], [], []>} : vector<8x128xbf16>, vector<128x128xbf16>, vector<8x128xf32> -> vector<8x128xf32>
    %21 = vector.broadcast %19 : vector<1x128xf32> to vector<8x128xf32>
    %22 = arith.addf %20, %21 : vector<8x128xf32>
    %c0_17 = arith.constant 0 : index
    %c0_18 = arith.constant 0 : index
    %23 = vector.load %arg8[%c0_17, %c0_18] : memref<8x128xf32, #tpu.memory_space<vmem>>, vector<8x128xf32>
    tpu.vector_store %arg8[%c0_17, %c0_18], %22 {strides = array<i32>} : memref<8x128xf32, #tpu.memory_space<vmem>>, vector<8x128xf32>,
    return
  }
  func.func @transform_0(%arg0: i32) -> (i32, i32) {
    %c0_i32 = arith.constant 0 : i32
    %c0_i32_0 = arith.constant 0 : i32
    return %arg0, %c0_i32 : i32, i32
  }
  func.func @transform_1(%arg0: i32) -> (i32, i32) {
    %c0_i32 = arith.constant 0 : i32
    %c0_i32_0 = arith.constant 0 : i32
    %c0_i32_1 = arith.constant 0 : i32
    return %c0_i32, %c0_i32_0 : i32, i32
  }
  func.func @transform_2(%arg0: i32) -> (i32, i32) {
    %c0_i32 = arith.constant 0 : i32
    %c0_i32_0 = arith.constant 0 : i32
    %c0_i32_1 = arith.constant 0 : i32
    return %c0_i32, %c0_i32_0 : i32, i32
  }
  func.func @transform_3(%arg0: i32) -> (i32, i32) {
    %c0_i32 = arith.constant 0 : i32
    %c0_i32_0 = arith.constant 0 : i32
    %c0_i32_1 = arith.constant 0 : i32
    return %c0_i32, %c0_i32_0 : i32, i32
  }
  func.func @transform_4(%arg0: i32) -> (i32, i32) {
    %c0_i32 = arith.constant 0 : i32
    %c0_i32_0 = arith.constant 0 : i32
    %c0_i32_1 = arith.constant 0 : i32
    return %c0_i32, %c0_i32_0 : i32, i32
  }
  func.func @transform_5(%arg0: i32) -> (i32, i32) {
    %c0_i32 = arith.constant 0 : i32
    %c0_i32_0 = arith.constant 0 : i32
    %c0_i32_1 = arith.constant 0 : i32
    return %c0_i32, %c0_i32_0 : i32, i32
  }
  func.func @transform_6(%arg0: i32) -> (i32, i32) {
    %c0_i32 = arith.constant 0 : i32
    %c0_i32_0 = arith.constant 0 : i32
    %c0_i32_1 = arith.constant 0 : i32
    return %c0_i32, %c0_i32_0 : i32, i32
  }
  func.func @transform_7(%arg0: i32) -> (i32, i32) {
    %c0_i32 = arith.constant 0 : i32
    %c0_i32_0 = arith.constant 0 : i32
    return %arg0, %c0_i32 : i32, i32
  }
}

</mosaic_0001>

<llo_original>
// kernel: fwd.1
$region0: #{fwd.1}
  #allocation0 [shape = 'u32[]', space=smem, size = 0x4, offset = 0x4, fixed_abs, tag = 'smem constant byte address 0x4 - core index']
  #allocation1 [shape = 'u32[144,128]{1,0:T(1,128)}', space=vmem, size = 0x12000, scoped, tag = 'internal scratch']
  %s0 = inlined_call_operand.hbm [shape: f32[8,32], index: 0, kind: input, shape index: {}]
  %s1 = inlined_call_operand.hbm [shape: bf16[32,128], index: 1, kind: input, shape index: {}]
  %s2 = inlined_call_operand.vmem [shape: f32[1,128], index: 2, kind: input, shape index: {}]
  %s3 = inlined_call_operand.hbm [shape: bf16[128,128], index: 3, kind: input, shape index: {}]
  %s4 = inlined_call_operand.vmem [shape: f32[1,128], index: 4, kind: input, shape index: {}]
  %s5 = inlined_call_operand.hbm [shape: bf16[128,128], index: 5, kind: input, shape index: {}]
  %s6 = inlined_call_operand.vmem [shape: f32[1,128], index: 6, kind: input, shape index: {}]
  %s7 = inlined_call_operand.vmem [shape: f32[8,128], index: 7, kind: output, shape index: {}]
  %s8 = sld [smem:[#allocation0]]
  $region54: #{fwd.1} parent=0
    _
  %s10 = ssub.s32 1, %s8
  %s11 = scalar_select 0, %s10, %s8
  $region1: #{fwd.1} parent=0
    #allocation2 [shape = 'u8[4096]{0}', space=vmem, size = 0x1000, scoped, tag = 'input window, operand 0, single buffered']
    #allocation3 [shape = 's32[1]{0}', space=sflag, size = 0x4, scoped, tag = 'scoped memory for fwd.1']
    #allocation4 [shape = 'u8[8192]{0}', space=vmem, size = 0x2000, scoped, tag = 'input window, operand 1, single buffered']
    #allocation5 [shape = 's32[1]{0}', space=sflag, size = 0x4, scoped, tag = 'scoped memory for fwd.1']
    #allocation6 [shape = 'u8[32768]{0}', space=vmem, size = 0x8000, scoped, tag = 'input window, operand 3, single buffered']
    #allocation7 [shape = 'u8[32768]{0}', space=vmem, size = 0x8000, scoped, tag = 'input window, operand 5, single buffered']
    #allocation8 [shape = 's32[1]{0}', space=sflag, size = 0x4, scoped, tag = 'scoped memory for fwd.1']
    %12 = vsyncpa [#allocation3], 0
    %13 = vsyncpa [#allocation5], 0
    %14 = vsyncpa [#allocation8], 0
    // Predicated region
    $region2: #{fwd.1} parent=1 // pred_check
      _
    $region3: #{fwd.1} parent=1 // pred_check_branch
      %16 = sbr.rel (0) target = $region5
    $region4: #{fwd.1} parent=1 // pred_region
      %s18 = ssub.s32 128, 128
      %19 = vsyncadd [#allocation3], %s18
      %s21 = sshll.u32 [#allocation2], 4
      %s22 = int_to_ptr.vmem [resolvable:$true] %s21
      %24 = dma.hbm_to_vmem [thread:$0]  %s0, 128, %s22, [#allocation3]
    $region5: #{fwd.1} parent=1 // pred_fallthru
      _
    // Predicated region
    $region6: #{fwd.1} parent=1 // pred_check
      _
    $region7: #{fwd.1} parent=1 // pred_check_branch
      %26 = sbr.rel (0) target = $region9
    $region8: #{fwd.1} parent=1 // pred_region
      %s28 = ssub.s32 256, 256
      %29 = vsyncadd [#allocation5], %s28
      %s30 = sshll.u32 [#allocation4], 4
      %s31 = int_to_ptr.vmem [resolvable:$true] %s30
      %36 = dma.hbm_to_vmem [thread:$0]  %s1, 256, %s31, [#allocation5], 64, 64, 4
    $region9: #{fwd.1} parent=1 // pred_fallthru
      _
    // Predicated region
    $region10: #{fwd.1} parent=1 // pred_check
      _
    $region11: #{fwd.1} parent=1 // pred_check_branch
      %38 = sbr.rel (0) target = $region13
    $region12: #{fwd.1} parent=1 // pred_region
      _
    $region13: #{fwd.1} parent=1 // pred_fallthru
      _
    // Predicated region
    $region14: #{fwd.1} parent=1 // pred_check
      _
    $region15: #{fwd.1} parent=1 // pred_check_branch
      %40 = sbr.rel (0) target = $region17
    $region16: #{fwd.1} parent=1 // pred_region
      %s42 = ssub.s32 1024, 1024
      %43 = vsyncadd [#allocation5], %s42
      %s44 = sshll.u32 [#allocation6], 4
      %s45 = int_to_ptr.vmem [resolvable:$true] %s44
      %50 = dma.hbm_to_vmem [thread:$0]  %s3, 1024, %s45, [#allocation5], 64, 64, 4
    $region17: #{fwd.1} parent=1 // pred_fallthru
      _
    // Predicated region
    $region18: #{fwd.1} parent=1 // pred_check
      _
    $region19: #{fwd.1} parent=1 // pred_check_branch
      %52 = sbr.rel (0) target = $region21
    $region20: #{fwd.1} parent=1 // pred_region
      _
    $region21: #{fwd.1} parent=1 // pred_fallthru
      _
    // Predicated region
    $region22: #{fwd.1} parent=1 // pred_check
      _
    $region23: #{fwd.1} parent=1 // pred_check_branch
      %54 = sbr.rel (0) target = $region25
    $region24: #{fwd.1} parent=1 // pred_region
      %s56 = ssub.s32 1024, 1024
      %57 = vsyncadd [#allocation8], %s56
      %s58 = sshll.u32 [#allocation7], 4
      %s59 = int_to_ptr.vmem [resolvable:$true] %s58
      %64 = dma.hbm_to_vmem [thread:$0]  %s5, 1024, %s59, [#allocation8], 64, 64, 4
    $region25: #{fwd.1} parent=1 // pred_fallthru
      _
    // Predicated region
    $region26: #{fwd.1} parent=1 // pred_check
      _
    $region27: #{fwd.1} parent=1 // pred_check_branch
      %66 = sbr.rel (0) target = $region29
    $region28: #{fwd.1} parent=1 // pred_region
      _
    $region29: #{fwd.1} parent=1 // pred_fallthru
      _
    // Predicated region
    $region30: #{fwd.1} parent=1 // pred_check
      _
    $region31: #{fwd.1} parent=1 // pred_check_branch
      %68 = sbr.rel (0) target = $region33
    $region32: #{fwd.1} parent=1 // pred_region
      %69 = dma.done [#allocation3], 128
    $region33: #{fwd.1} parent=1 // pred_fallthru
      _
    // Predicated region
    $region34: #{fwd.1} parent=1 // pred_check
      _
    $region35: #{fwd.1} parent=1 // pred_check_branch
      %71 = sbr.rel (0) target = $region37
    $region36: #{fwd.1} parent=1 // pred_region
      %72 = dma.done [#allocation5], 256
    $region37: #{fwd.1} parent=1 // pred_fallthru
      _
    // Predicated region
    $region38: #{fwd.1} parent=1 // pred_check
      _
    $region39: #{fwd.1} parent=1 // pred_check_branch
      %74 = sbr.rel (0) target = $region41
    $region40: #{fwd.1} parent=1 // pred_region
      %75 = dma.done [#allocation5], 1024
    $region41: #{fwd.1} parent=1 // pred_fallthru
      _
    // Predicated region
    $region42: #{fwd.1} parent=1 // pred_check
      _
    $region43: #{fwd.1} parent=1 // pred_check_branch
      %77 = sbr.rel (0) target = $region45
    $region44: #{fwd.1} parent=1 // pred_region
      %78 = dma.done [#allocation8], 1024
    $region45: #{fwd.1} parent=1 // pred_fallthru
      _
    %v80 = vld [vmem:[#allocation2] sm:$0xff]
    %v81 = vpack.c.bf16 %v80, %v80
    %v82 = vld [vmem:[#allocation4] sm:$0xf]
    %v83 = vld [vmem:[#allocation4 + $0x4] sm:$0xf]
    %v84 = vld [vmem:[#allocation4 + $0x8] sm:$0xf]
    %v85 = vld [vmem:[#allocation4 + $0xc] sm:$0xf]
    %v86 = vld [vmem:[%s2] sm:$0x1]
    %v88 = vlaneseq
    %v89 = vshrl.u32 %v88, 7
    %v90 = vsub.s32 0, %v89
    %v91 = vrot.slane %v86, %v90
    %v97 = vunpack.c.l.b16 %v82
    %v98 = vunpack.c.l.b16 %v83
    %v99 = vunpack.c.l.b16 %v84
    %v100 = vunpack.c.l.b16 %v85
    %v101 = vpack.c.b16 %v98, %v97
    %v102 = vpack.c.b16 %v100, %v99
    %vm105 = vcmask 261120
    %v107 = vsel %vm105, %v81, 0
    %109 = vmatprep.subr.bf16.mxu0 0
    %110 = vmatpush1.bf16.msra.mxu0 0
    %111 = vmatprep.subr.bf16.mxu0 0
    %112 = vmatpush1.bf16.msra.mxu0 0
    %113 = vmatprep.subr.bf16.mxu0 0
    %114 = vmatpush1.bf16.msra.mxu0 0
    %115 = vmatprep.subr.bf16.mxu0 0
    %116 = vmatpush1.bf16.msra.mxu0 0
    %117 = vmatprep.subr.bf16.mxu0 0
    %118 = vmatpush1.bf16.msra.mxu0 0
    %119 = vmatprep.subr.bf16.mxu0 0
    %120 = vmatpush1.bf16.msra.mxu0 0
    %121 = vmatprep.subr.bf16.mxu0 0
    %122 = vmatpush1.bf16.msra.mxu0 %v102
    %123 = vmatprep.subr.bf16.mxu0 0
    %124 = vmatpush1.bf16.msra.mxu0 %v101
    %125 = vmatprep.subr.bf16.mxu0 0
    %126 = vmatpush2.bf16.msra.mxu0 0
    %127 = vmatprep.subr.bf16.mxu0 0
    %128 = vmatpush2.bf16.msra.mxu0 0
    %129 = vmatprep.subr.bf16.mxu0 0
    %130 = vmatpush2.bf16.msra.mxu0 0
    %131 = vmatprep.subr.bf16.mxu0 0
    %132 = vmatpush2.bf16.msra.mxu0 0
    %133 = vmatprep.subr.bf16.mxu0 0
    %134 = vmatpush2.bf16.msra.mxu0 0
    %135 = vmatprep.subr.bf16.mxu0 0
    %136 = vmatpush2.bf16.msra.mxu0 0
    %137 = vmatprep.subr.bf16.mxu0 0
    %138 = vmatpush2.bf16.msra.mxu0 0
    %139 = vmatprep.subr.bf16.mxu0 0
    %140 = vmatpush2.bf16.msra.mxu0 0
    %141 = vmatprep.mubr.bf16.mxu0 0
    %142 = vmatmul.mubr.bf16.gmra.mxu0 %v107
    %v143 = vpop.f32.mrf.mxu0
    %v144 = vadd.f32 %v91, %v143
    %v145 = vpop.f32.mrf.mxu0
    %v146 = vpop.f32.mrf.mxu0
    %v147 = vpop.f32.mrf.mxu0
    %148 = vdwg.mxu0
    %v149 = vmax.f32 %v144, 0.0
    %v150 = vpack.c.bf16 %v149, %v149
    %v151 = vld [vmem:[#allocation6] sm:$0xf]
    %v152 = vld [vmem:[#allocation6 + $0x4] sm:$0xf]
    %v153 = vld [vmem:[#allocation6 + $0x8] sm:$0xf]
    %v154 = vld [vmem:[#allocation6 + $0xc] sm:$0xf]
    %v155 = vld [vmem:[#allocation6 + $0x10] sm:$0xf]
    %v156 = vld [vmem:[#allocation6 + $0x14] sm:$0xf]
    %v157 = vld [vmem:[#allocation6 + $0x18] sm:$0xf]
    %v158 = vld [vmem:[#allocation6 + $0x1c] sm:$0xf]
    %v159 = vld [vmem:[#allocation6 + $0x20] sm:$0xf]
    %v160 = vld [vmem:[#allocation6 + $0x24] sm:$0xf]
    %v161 = vld [vmem:[#allocation6 + $0x28] sm:$0xf]
    %v162 = vld [vmem:[#allocation6 + $0x2c] sm:$0xf]
    %v163 = vld [vmem:[#allocation6 + $0x30] sm:$0xf]
    %v164 = vld [vmem:[#allocation6 + $0x34] sm:$0xf]
    %v165 = vld [vmem:[#allocation6 + $0x38] sm:$0xf]
    %v166 = vld [vmem:[#allocation6 + $0x3c] sm:$0xf]
    %v167 = vld [vmem:[%s4] sm:$0x1]
    %v169 = vlaneseq
    %v170 = vshrl.u32 %v169, 7
    %v171 = vsub.s32 0, %v170
    %v172 = vrot.slane %v167, %v171
    %v190 = vunpack.c.l.b16 %v151
    %v191 = vunpack.c.l.b16 %v152
    %v192 = vunpack.c.l.b16 %v153
    %v193 = vunpack.c.l.b16 %v154
    %v194 = vunpack.c.l.b16 %v155
    %v195 = vunpack.c.l.b16 %v156
    %v196 = vunpack.c.l.b16 %v157
    %v197 = vunpack.c.l.b16 %v158
    %v198 = vunpack.c.l.b16 %v159
    %v199 = vunpack.c.l.b16 %v160
    %v200 = vunpack.c.l.b16 %v161
    %v201 = vunpack.c.l.b16 %v162
    %v202 = vunpack.c.l.b16 %v163
    %v203 = vunpack.c.l.b16 %v164
    %v204 = vunpack.c.l.b16 %v165
    %v205 = vunpack.c.l.b16 %v166
    %v206 = vpack.c.b16 %v191, %v190
    %v207 = vpack.c.b16 %v193, %v192
    %v208 = vpack.c.b16 %v195, %v194
    %v209 = vpack.c.b16 %v197, %v196
    %v210 = vpack.c.b16 %v199, %v198
    %v211 = vpack.c.b16 %v201, %v200
    %v212 = vpack.c.b16 %v203, %v202
    %v213 = vpack.c.b16 %v205, %v204
    %222 = vmatprep.subr.bf16.mxu0 0
    %223 = vmatpush1.bf16.msra.mxu0 %v213
    %224 = vmatprep.subr.bf16.mxu0 0
    %225 = vmatpush1.bf16.msra.mxu0 %v212
    %226 = vmatprep.subr.bf16.mxu0 0
    %227 = vmatpush1.bf16.msra.mxu0 %v211
    %228 = vmatprep.subr.bf16.mxu0 0
    %229 = vmatpush1.bf16.msra.mxu0 %v210
    %230 = vmatprep.subr.bf16.mxu0 0
    %231 = vmatpush1.bf16.msra.mxu0 %v209
    %232 = vmatprep.subr.bf16.mxu0 0
    %233 = vmatpush1.bf16.msra.mxu0 %v208
    %234 = vmatprep.subr.bf16.mxu0 0
    %235 = vmatpush1.bf16.msra.mxu0 %v207
    %236 = vmatprep.subr.bf16.mxu0 0
    %237 = vmatpush1.bf16.msra.mxu0 %v206
    %238 = vmatprep.subr.bf16.mxu0 0
    %239 = vmatpush2.bf16.msra.mxu0 0
    %240 = vmatprep.subr.bf16.mxu0 0
    %241 = vmatpush2.bf16.msra.mxu0 0
    %242 = vmatprep.subr.bf16.mxu0 0
    %243 = vmatpush2.bf16.msra.mxu0 0
    %244 = vmatprep.subr.bf16.mxu0 0
    %245 = vmatpush2.bf16.msra.mxu0 0
    %246 = vmatprep.subr.bf16.mxu0 0
    %247 = vmatpush2.bf16.msra.mxu0 0
    %248 = vmatprep.subr.bf16.mxu0 0
    %249 = vmatpush2.bf16.msra.mxu0 0
    %250 = vmatprep.subr.bf16.mxu0 0
    %251 = vmatpush2.bf16.msra.mxu0 0
    %252 = vmatprep.subr.bf16.mxu0 0
    %253 = vmatpush2.bf16.msra.mxu0 0
    %254 = vmatprep.mubr.bf16.mxu0 0
    %255 = vmatmul.mubr.bf16.gmra.mxu0 %v150
    %v256 = vpop.f32.mrf.mxu0
    %v257 = vadd.f32 %v172, %v256
    %v258 = vpop.f32.mrf.mxu0
    %v259 = vpop.f32.mrf.mxu0
    %v260 = vpop.f32.mrf.mxu0
    %261 = vdwg.mxu0
    %v262 = vmax.f32 %v257, 0.0
    %v263 = vpack.c.bf16 %v262, %v262
    %v264 = vld [vmem:[#allocation7] sm:$0xf]
    %v265 = vld [vmem:[#allocation7 + $0x4] sm:$0xf]
    %v266 = vld [vmem:[#allocation7 + $0x8] sm:$0xf]
    %v267 = vld [vmem:[#allocation7 + $0xc] sm:$0xf]
    %v268 = vld [vmem:[#allocation7 + $0x10] sm:$0xf]
    %v269 = vld [vmem:[#allocation7 + $0x14] sm:$0xf]
    %v270 = vld [vmem:[#allocation7 + $0x18] sm:$0xf]
    %v271 = vld [vmem:[#allocation7 + $0x1c] sm:$0xf]
    %v272 = vld [vmem:[#allocation7 + $0x20] sm:$0xf]
    %v273 = vld [vmem:[#allocation7 + $0x24] sm:$0xf]
    %v274 = vld [vmem:[#allocation7 + $0x28] sm:$0xf]
    %v275 = vld [vmem:[#allocation7 + $0x2c] sm:$0xf]
    %v276 = vld [vmem:[#allocation7 + $0x30] sm:$0xf]
    %v277 = vld [vmem:[#allocation7 + $0x34] sm:$0xf]
    %v278 = vld [vmem:[#allocation7 + $0x38] sm:$0xf]
    %v279 = vld [vmem:[#allocation7 + $0x3c] sm:$0xf]
    %v280 = vld [vmem:[%s6] sm:$0x1]
    %v282 = vlaneseq
    %v283 = vshrl.u32 %v282, 7
    %v284 = vsub.s32 0, %v283
    %v285 = vrot.slane %v280, %v284
    %v303 = vunpack.c.l.b16 %v264
    %v304 = vunpack.c.l.b16 %v265
    %v305 = vunpack.c.l.b16 %v266
    %v306 = vunpack.c.l.b16 %v267
    %v307 = vunpack.c.l.b16 %v268
    %v308 = vunpack.c.l.b16 %v269
    %v309 = vunpack.c.l.b16 %v270
    %v310 = vunpack.c.l.b16 %v271
    %v311 = vunpack.c.l.b16 %v272
    %v312 = vunpack.c.l.b16 %v273
    %v313 = vunpack.c.l.b16 %v274
    %v314 = vunpack.c.l.b16 %v275
    %v315 = vunpack.c.l.b16 %v276
    %v316 = vunpack.c.l.b16 %v277
    %v317 = vunpack.c.l.b16 %v278
    %v318 = vunpack.c.l.b16 %v279
    %v319 = vpack.c.b16 %v304, %v303
    %v320 = vpack.c.b16 %v306, %v305
    %v321 = vpack.c.b16 %v308, %v307
    %v322 = vpack.c.b16 %v310, %v309
    %v323 = vpack.c.b16 %v312, %v311
    %v324 = vpack.c.b16 %v314, %v313
    %v325 = vpack.c.b16 %v316, %v315
    %v326 = vpack.c.b16 %v318, %v317
    %335 = vmatprep.subr.bf16.mxu0 0
    %336 = vmatpush1.bf16.msra.mxu0 %v326
    %337 = vmatprep.subr.bf16.mxu0 0
    %338 = vmatpush1.bf16.msra.mxu0 %v325
    %339 = vmatprep.subr.bf16.mxu0 0
    %340 = vmatpush1.bf16.msra.mxu0 %v324
    %341 = vmatprep.subr.bf16.mxu0 0
    %342 = vmatpush1.bf16.msra.mxu0 %v323
    %343 = vmatprep.subr.bf16.mxu0 0
    %344 = vmatpush1.bf16.msra.mxu0 %v322
    %345 = vmatprep.subr.bf16.mxu0 0
    %346 = vmatpush1.bf16.msra.mxu0 %v321
    %347 = vmatprep.subr.bf16.mxu0 0
    %348 = vmatpush1.bf16.msra.mxu0 %v320
    %349 = vmatprep.subr.bf16.mxu0 0
    %350 = vmatpush1.bf16.msra.mxu0 %v319
    %351 = vmatprep.subr.bf16.mxu0 0
    %352 = vmatpush2.bf16.msra.mxu0 0
    %353 = vmatprep.subr.bf16.mxu0 0
    %354 = vmatpush2.bf16.msra.mxu0 0
    %355 = vmatprep.subr.bf16.mxu0 0
    %356 = vmatpush2.bf16.msra.mxu0 0
    %357 = vmatprep.subr.bf16.mxu0 0
    %358 = vmatpush2.bf16.msra.mxu0 0
    %359 = vmatprep.subr.bf16.mxu0 0
    %360 = vmatpush2.bf16.msra.mxu0 0
    %361 = vmatprep.subr.bf16.mxu0 0
    %362 = vmatpush2.bf16.msra.mxu0 0
    %363 = vmatprep.subr.bf16.mxu0 0
    %364 = vmatpush2.bf16.msra.mxu0 0
    %365 = vmatprep.subr.bf16.mxu0 0
    %366 = vmatpush2.bf16.msra.mxu0 0
    %367 = vmatprep.mubr.bf16.mxu0 0
    %368 = vmatmul.mubr.bf16.gmra.mxu0 %v263
    %v369 = vpop.f32.mrf.mxu0
    %v370 = vadd.f32 %v285, %v369
    %v371 = vpop.f32.mrf.mxu0
    %v372 = vpop.f32.mrf.mxu0
    %v373 = vpop.f32.mrf.mxu0
    %374 = vdwg.mxu0
    %375 = vst [vmem:[%s7] sm:$0xff] %v370
    // Predicated region
    $region46: #{fwd.1} parent=1 // pred_check
      _
    $region47: #{fwd.1} parent=1 // pred_check_branch
      %377 = sbr.rel (0) target = $region49
    $region48: #{fwd.1} parent=1 // pred_region
      _
    $region49: #{fwd.1} parent=1 // pred_fallthru
      _
    // Predicated region
    $region50: #{fwd.1} parent=1 // pred_check
      _
    $region51: #{fwd.1} parent=1 // pred_check_branch
      %379 = sbr.rel (0) target = $region53
    $region52: #{fwd.1} parent=1 // pred_region
      _
    $region53: #{fwd.1} parent=1 // pred_fallthru
      _
    %380 = vsyncpa [#allocation3], 1
    %381 = vsyncpa [#allocation5], 1
    %382 = vsyncpa [#allocation8], 1

</llo_original>
